<compile_context>
chip_gen: v6e
topology: v6e:2x2x1
jax: 0.10.0
libtpu: 0.0.40
codegen_flags: <defaults>
</compile_context>

<pallas_src>
import functools

import jax
import jax.numpy as jnp
from jax.experimental import pallas as pl
from jax.experimental.pallas import tpu as pltpu

# Conservative scoped-VMEM limit: below v7x's 64 MiB physical, fine on v5e/v6e.
VMEM_LIMIT = 48 * 1024 * 1024


def _pick_tile(dim, target, multiple):
    """Largest divisor of `dim` that is <= target and a multiple of `multiple`.
    Falls back to the full dim (always legal: block dim == full array dim)."""
    if dim <= target:
        return dim
    t = (target // multiple) * multiple
    while t >= multiple:
        if dim % t == 0:
            return t
        t -= multiple
    return dim


# ----------------------------------------------------------------------------
# Tiled linear with fused epilogue (bias, optional GELU, optional residual + LN)
# ----------------------------------------------------------------------------

def _linear_kernel(*refs, activation, fuse_ln, eps):
    if fuse_ln:
        x_ref, w_ref, b_ref, res_ref, g_ref, beta_ref, o_ref, acc_ref = refs
    else:
        x_ref, w_ref, b_ref, o_ref, acc_ref = refs

    k = pl.program_id(2)

    @pl.when(k == 0)
    def _init():
        acc_ref[...] = jnp.zeros_like(acc_ref)

    # bf16 MXU inputs, f32 accumulation.
    acc_ref[...] += jnp.dot(
        x_ref[...].astype(jnp.bfloat16),
        w_ref[...],  # weights are stored bf16
        preferred_element_type=jnp.float32,
    )

    @pl.when(k == pl.num_programs(2) - 1)
    def _epilogue():
        y = acc_ref[...] + b_ref[...]
        if activation == "gelu":
            # tanh-approx GELU  TODO(synk): HF BERT default is exact erf-GELU
            c = 0.7978845608028654  # sqrt(2/pi)
            y = 0.5 * y * (1.0 + jnp.tanh(c * (y + 0.044715 * y * y * y)))
        if fuse_ln:
            y = y + res_ref[...]
            mu = jnp.mean(y, axis=-1, keepdims=True)
            yc = y - mu
            var = jnp.mean(yc * yc, axis=-1, keepdims=True)
            y = yc * jax.lax.rsqrt(var + eps) * g_ref[...] + beta_ref[...]
        o_ref[...] = y


def linear(x, w, b, *, activation=None, residual=None, ln_g=None, ln_b=None,
           eps=1e-12, tile_m_target=256, tile_n_target=512, tile_k_target=256):
    """y = x @ w + b  (+ GELU)  (+ residual, LayerNorm).  x f32 [M,K], w bf16 [K,N]."""
    M, K = x.shape
    K2, N = w.shape
    assert K == K2
    fuse_ln = ln_g is not None

    tm = _pick_tile(M, tile_m_target, 8)
    tk = _pick_tile(K, tile_k_target, 128)
    # LayerNorm reduces over the full output row -> need tn == N for the fused path.
    tn = N if fuse_ln else _pick_tile(N, tile_n_target, 128)

    in_specs = [
        pl.BlockSpec((tm, tk), lambda i, j, k: (i, k)),
        pl.BlockSpec((tk, tn), lambda i, j, k: (k, j)),
        pl.BlockSpec((1, tn), lambda i, j, k: (0, j)),
    ]
    inputs = [x, w, b.reshape(1, N)]
    if fuse_ln:
        in_specs += [
            pl.BlockSpec((tm, tn), lambda i, j, k: (i, j)),   # residual (tn == N)
            pl.BlockSpec((1, tn), lambda i, j, k: (0, 0)),    # gamma
            pl.BlockSpec((1, tn), lambda i, j, k: (0, 0)),    # beta
        ]
        inputs += [residual, ln_g.reshape(1, N), ln_b.reshape(1, N)]

    return pl.pallas_call(
        functools.partial(_linear_kernel, activation=activation,
                          fuse_ln=fuse_ln, eps=eps),
        grid=(M // tm, N // tn, K // tk),
        in_specs=in_specs,
        out_specs=pl.BlockSpec((tm, tn), lambda i, j, k: (i, j)),
        out_shape=jax.ShapeDtypeStruct((M, N), jnp.float32),
        scratch_shapes=[pltpu.VMEM((tm, tn), jnp.float32)],
        compiler_params=pltpu.CompilerParams(
            dimension_semantics=("parallel", "parallel", "arbitrary"),
            vmem_limit_bytes=VMEM_LIMIT),
    )(*inputs)


# ----------------------------------------------------------------------------
# Standalone LayerNorm (used once, after the embedding sum)
# ----------------------------------------------------------------------------

def _layernorm_kernel(x_ref, g_ref, b_ref, o_ref, *, eps):
    x = x_ref[...]
    mu = jnp.mean(x, axis=-1, keepdims=True)
    xc = x - mu
    var = jnp.mean(xc * xc, axis=-1, keepdims=True)
    o_ref[...] = xc * jax.lax.rsqrt(var + eps) * g_ref[...] + b_ref[...]


def layernorm(x, g, b, eps=1e-12, tile_m_target=256):
    M, H = x.shape
    tm = _pick_tile(M, tile_m_target, 8)
    return pl.pallas_call(
        functools.partial(_layernorm_kernel, eps=eps),
        grid=(M // tm,),
        in_specs=[pl.BlockSpec((tm, H), lambda i: (i, 0)),
                  pl.BlockSpec((1, H), lambda i: (0, 0)),
                  pl.BlockSpec((1, H), lambda i: (0, 0))],
        out_specs=pl.BlockSpec((tm, H), lambda i: (i, 0)),
        out_shape=jax.ShapeDtypeStruct((M, H), jnp.float32),
        compiler_params=pltpu.CompilerParams(
            dimension_semantics=("parallel",),
            vmem_limit_bytes=VMEM_LIMIT),
    )(x, g.reshape(1, H), b.reshape(1, H))


# ----------------------------------------------------------------------------
# Per-(batch, head) attention, reading/writing Dh-column blocks directly
# ----------------------------------------------------------------------------

def _attention_kernel(q_ref, k_ref, v_ref, bias_ref, o_ref, *, scale):
    q = q_ref[0].astype(jnp.bfloat16)          # [S, Dh]
    k = k_ref[0].astype(jnp.bfloat16)          # [S, Dh]
    v = v_ref[0].astype(jnp.bfloat16)          # [S, Dh]
    # scores in f32 (mask addition and softmax stay full precision)
    s = jax.lax.dot_general(q, k, (((1,), (1,)), ((), ())),
                            preferred_element_type=jnp.float32) * scale
    s = s + bias_ref[0]                        # [S, S] + [1, S]
    m = jnp.max(s, axis=-1, keepdims=True)
    p = jnp.exp(s - m)
    denom = jnp.sum(p, axis=-1, keepdims=True)
    p = p * pl.reciprocal(denom, approx=True)  # EUP reciprocal, co-issues with MXU/VALU
    o_ref[0] = jnp.dot(p.astype(jnp.bfloat16), v, preferred_element_type=jnp.float32)


def attention(qkv, bias, *, n_heads):
    """qkv: [B, S, 3H] (q|k|v concatenated along the last dim, head-contiguous).
    bias: [B, 1, S] additive mask.  Returns context [B, S, H] (heads merged)."""
    B, S, threeH = qkv.shape
    H = threeH // 3
    Dh = H // n_heads
    nh = n_heads
    scale = 1.0 / float(Dh) ** 0.5
    return pl.pallas_call(
        functools.partial(_attention_kernel, scale=scale),
        grid=(B, n_heads),
        in_specs=[
            pl.BlockSpec((1, S, Dh), lambda b, h: (b, 0, h)),            # Q head h
            pl.BlockSpec((1, S, Dh), lambda b, h: (b, 0, nh + h)),       # K head h
            pl.BlockSpec((1, S, Dh), lambda b, h: (b, 0, 2 * nh + h)),   # V head h
            pl.BlockSpec((1, 1, S), lambda b, h: (b, 0, 0)),             # mask bias
        ],
        out_specs=pl.BlockSpec((1, S, Dh), lambda b, h: (b, 0, h)),      # ctx cols of head h
        out_shape=jax.ShapeDtypeStruct((B, S, H), jnp.float32),
        compiler_params=pltpu.CompilerParams(
            dimension_semantics=("parallel", "parallel"),
            vmem_limit_bytes=VMEM_LIMIT),
    )(qkv, qkv, qkv, bias)


# ----------------------------------------------------------------------------
# Parameters (deterministic stand-in for the frozen pretrained checkpoint)
# ----------------------------------------------------------------------------

def init_params(key, *, vocab, hidden, n_layers, n_heads, inter, max_seq, out_dim):
    std = 0.02
    keys = jax.random.split(key, 4 + n_layers)

    def nrm(k, shape):  # matmul weights stored bf16 (halves weight HBM traffic)
        return (std * jax.random.normal(k, shape, dtype=jnp.float32)).astype(jnp.bfloat16)

    def nrm32(k, shape):
        return std * jax.random.normal(k, shape, dtype=jnp.float32)

    params = {
        "word_emb": nrm32(keys[0], (vocab, hidden)),
        "pos_emb": nrm32(keys[1], (max_seq, hidden)),
        "type_emb": nrm32(keys[2], (2, hidden)),
        "emb_ln_g": jnp.ones((hidden,), jnp.float32),
        "emb_ln_b": jnp.zeros((hidden,), jnp.float32),
        "proj_w": nrm(keys[3], (hidden, out_dim)),
        "proj_b": jnp.zeros((out_dim,), jnp.float32),
        "layers": [],
    }
    for li in range(n_layers):
        lk = jax.random.split(keys[4 + li], 4)
        params["layers"].append({
            # fused QKV weight: [H, 3H] = [Wq | Wk | Wv]
            "wqkv": nrm(lk[0], (hidden, 3 * hidden)),
            "bqkv": jnp.zeros((3 * hidden,), jnp.float32),
            "wo": nrm(lk[1], (hidden, hidden)), "bo": jnp.zeros((hidden,), jnp.float32),
            "ln1_g": jnp.ones((hidden,), jnp.float32), "ln1_b": jnp.zeros((hidden,), jnp.float32),
            "w1": nrm(lk[2], (hidden, inter)), "b1": jnp.zeros((inter,), jnp.float32),
            "w2": nrm(lk[3], (inter, hidden)), "b2": jnp.zeros((hidden,), jnp.float32),
            "ln2_g": jnp.ones((hidden,), jnp.float32), "ln2_b": jnp.zeros((hidden,), jnp.float32),
        })
    return params


# ----------------------------------------------------------------------------
# Model forward (glue is gathers / free reshapes only; hot paths are kernels)
# ----------------------------------------------------------------------------

def bert_text_encoder(params, input_ids, attention_mask, *, n_heads):
    B, S = input_ids.shape
    H = params["word_emb"].shape[1]

    # ----- embeddings (gather is glue) + LayerNorm kernel -----
    word = jnp.take(params["word_emb"], input_ids, axis=0)            # [B, S, H]
    pos = params["pos_emb"][:S][None, :, :]                           # [1, S, H]
    typ = params["type_emb"][0][None, None, :]                        # token_type_ids = 0
    x = (word + pos + typ).reshape(B * S, H)
    x = layernorm(x, params["emb_ln_g"], params["emb_ln_b"])

    # additive attention bias from mask, [B, 1, S] f32
    bias = ((1.0 - attention_mask.astype(jnp.float32)) * -1e9).reshape(B, 1, S)

    for lp in params["layers"]:
        # fused Q/K/V projection: [B*S, 3H]
        qkv = linear(x, lp["wqkv"], lp["bqkv"])
        # per-(batch, head) attention; heads merged directly into [B, S, H]
        ctx = attention(qkv.reshape(B, S, 3 * H), bias, n_heads=n_heads)
        # attention output projection + residual + LayerNorm (fused epilogue)
        x = linear(ctx.reshape(B * S, H), lp["wo"], lp["bo"],
                   residual=x, ln_g=lp["ln1_g"], ln_b=lp["ln1_b"])
        # FFN: up-proj + GELU (fused), down-proj + residual + LayerNorm (fused)
        h = linear(x, lp["w1"], lp["b1"], activation="gelu")
        x = linear(h, lp["w2"], lp["b2"],
                   residual=x, ln_g=lp["ln2_g"], ln_b=lp["ln2_b"])

    # ----- final projection (self.projection) -----
    out_dim = params["proj_w"].shape[1]
    text_embedding = linear(x, params["proj_w"], params["proj_b"]).reshape(B, S, out_dim)
    return text_embedding, input_ids, attention_mask


# ----------------------------------------------------------------------------
# Main
# ----------------------------------------------------------------------------

if __name__ == "__main__":
    # Small synthetic config, kept lane-dense (H, Dh, inter, out_dim multiples of 128).
    VOCAB, HIDDEN, N_LAYERS, N_HEADS, INTER = 1000, 256, 2, 2, 512   # Dh = 128
    MAX_SEQ, OUT_DIM = 64, 256
    B, S = 2, 16

    key = jax.random.PRNGKey(0)
    pkey, ikey = jax.random.split(key)

    params = init_params(pkey, vocab=VOCAB, hidden=HIDDEN, n_layers=N_LAYERS,
                         n_heads=N_HEADS, inter=INTER, max_seq=MAX_SEQ, out_dim=OUT_DIM)

    input_ids = jax.random.randint(ikey, (B, S), 0, VOCAB, dtype=jnp.int32)
    attention_mask = jnp.ones((B, S), dtype=jnp.int32)
    attention_mask = attention_mask.at[1, 12:].set(0)   # simulate padding on sample 1

    emb, ids, mask = bert_text_encoder(params, input_ids, attention_mask, n_heads=N_HEADS)
    jax.block_until_ready(emb)

    assert emb.shape == (B, S, OUT_DIM)
    assert ids.shape == (B, S) and mask.shape == (B, S)
    assert bool(jnp.all(jnp.isfinite(emb)))
    print("KERNEL_OK")
</pallas_src>

<mosaic_0001>
module attributes {stable_mosaic.version = 11 : i64} {
  func.func @_layernorm_kernel(%arg0: i32, %arg1: memref<32x256xf32, #tpu.memory_space<vmem>>, %arg2: memref<1x256xf32, #tpu.memory_space<vmem>>, %arg3: memref<1x256xf32, #tpu.memory_space<vmem>>, %arg4: memref<32x256xf32, #tpu.memory_space<vmem>>) attributes {dimension_semantics = [#tpu.dimension_semantics<parallel>], iteration_bounds = array<i64: 1>, scalar_prefetch = 0 : i64, scratch_operands = 0 : i64, tpu.core_type = #tpu.core_type<tc>, window_params = [{transform_indices = @transform_0, window_bounds = array<i64: 32, 256>}, {pipeline_mode = #tpu.pipeline_mode<synchronous>, transform_indices = @transform_1, window_bounds = array<i64: 1, 256>}, {pipeline_mode = #tpu.pipeline_mode<synchronous>, transform_indices = @transform_2, window_bounds = array<i64: 1, 256>}, {transform_indices = @transform_3, window_bounds = array<i64: 32, 256>}]} {
    %c0 = arith.constant 0 : index
    %c0_0 = arith.constant 0 : index
    %0 = vector.load %arg1[%c0, %c0_0] : memref<32x256xf32, #tpu.memory_space<vmem>>, vector<32x256xf32>
    %cst = arith.constant dense<0.000000e+00> : vector<32xf32>
    %1 = vector.multi_reduction <add>, %0, %cst [1] : vector<32x256xf32> to vector<32xf32>
    %2 = vector.shape_cast %1 : vector<32xf32> to vector<32x1xf32>
    %cst_1 = arith.constant 2.560000e+02 : f32
    %3 = vector.broadcast %cst_1 : f32 to vector<32x1xf32>
    %4 = arith.divf %2, %3 : vector<32x1xf32>
    %5 = vector.broadcast %4 : vector<32x1xf32> to vector<32x256xf32>
    %6 = arith.subf %0, %5 : vector<32x256xf32>
    %7 = arith.mulf %6, %6 : vector<32x256xf32>
    %cst_2 = arith.constant dense<0.000000e+00> : vector<32xf32>
    %8 = vector.multi_reduction <add>, %7, %cst_2 [1] : vector<32x256xf32> to vector<32xf32>
    %9 = vector.shape_cast %8 : vector<32xf32> to vector<32x1xf32>
    %cst_3 = arith.constant 2.560000e+02 : f32
    %10 = vector.broadcast %cst_3 : f32 to vector<32x1xf32>
    %11 = arith.divf %9, %10 : vector<32x1xf32>
    %cst_4 = arith.constant 9.99999996E-13 : f32
    %12 = vector.broadcast %cst_4 : f32 to vector<32x1xf32>
    %13 = arith.addf %11, %12 : vector<32x1xf32>
    %14 = math.rsqrt %13 : vector<32x1xf32>
    %15 = vector.broadcast %14 : vector<32x1xf32> to vector<32x256xf32>
    %16 = arith.mulf %6, %15 : vector<32x256xf32>
    %c0_5 = arith.constant 0 : index
    %c0_6 = arith.constant 0 : index
    %17 = vector.load %arg2[%c0_5, %c0_6] : memref<1x256xf32, #tpu.memory_space<vmem>>, vector<1x256xf32>
    %18 = vector.broadcast %17 : vector<1x256xf32> to vector<32x256xf32>
    %19 = arith.mulf %16, %18 : vector<32x256xf32>
    %c0_7 = arith.constant 0 : index
    %c0_8 = arith.constant 0 : index
    %20 = vector.load %arg3[%c0_7, %c0_8] : memref<1x256xf32, #tpu.memory_space<vmem>>, vector<1x256xf32>
    %21 = vector.broadcast %20 : vector<1x256xf32> to vector<32x256xf32>
    %22 = arith.addf %19, %21 : vector<32x256xf32>
    %c0_9 = arith.constant 0 : index
    %c0_10 = arith.constant 0 : index
    %23 = vector.load %arg4[%c0_9, %c0_10] : memref<32x256xf32, #tpu.memory_space<vmem>>, vector<32x256xf32>
    tpu.vector_store %arg4[%c0_9, %c0_10], %22 {strides = array<i32>} : memref<32x256xf32, #tpu.memory_space<vmem>>, vector<32x256xf32>,
    return
  }
  func.func @transform_0(%arg0: i32) -> (i32, i32) {
    %c0_i32 = arith.constant 0 : i32
    %c0_i32_0 = arith.constant 0 : i32
    return %arg0, %c0_i32 : i32, i32
  }
  func.func @transform_1(%arg0: i32) -> (i32, i32) {
    %c0_i32 = arith.constant 0 : i32
    %c0_i32_0 = arith.constant 0 : i32
    %c0_i32_1 = arith.constant 0 : i32
    return %c0_i32, %c0_i32_0 : i32, i32
  }
  func.func @transform_2(%arg0: i32) -> (i32, i32) {
    %c0_i32 = arith.constant 0 : i32
    %c0_i32_0 = arith.constant 0 : i32
    %c0_i32_1 = arith.constant 0 : i32
    return %c0_i32, %c0_i32_0 : i32, i32
  }
  func.func @transform_3(%arg0: i32) -> (i32, i32) {
    %c0_i32 = arith.constant 0 : i32
    %c0_i32_0 = arith.constant 0 : i32
    return %arg0, %c0_i32 : i32, i32
  }
}

</mosaic_0001>

<llo_original>
// kernel: tpu_custom_call.1
$region0: #{tpu_custom_call.1}
  #allocation0 [shape = 'u32[]', space=smem, size = 0x4, offset = 0x4, fixed_abs, tag = 'smem constant byte address 0x4 - core index']
  #allocation1 [shape = 'u32[144,128]{1,0:T(1,128)}', space=vmem, size = 0x12000, scoped, tag = 'internal scratch']
  %s0 = inlined_call_operand.hbm [shape: f32[32,256], index: 0, kind: input, shape index: {}]
  %s1 = inlined_call_operand.hbm [shape: f32[1,256], index: 1, kind: input, shape index: {}]
  %s2 = inlined_call_operand.vmem [shape: f32[1,256], index: 2, kind: input, shape index: {}]
  %s3 = inlined_call_operand.hbm [shape: f32[32,256], index: 3, kind: output, shape index: {}]
  %s4 = sld [smem:[#allocation0]]
  $region30: #{tpu_custom_call.1} parent=0
    _
  %s6 = ssub.s32 1, %s4
  %s7 = scalar_select 0, %s6, %s4
  $region1: #{tpu_custom_call.1} parent=0
    #allocation2 [shape = 'u8[32768]{0}', space=vmem, size = 0x8000, scoped, tag = 'input window, operand 0, single buffered']
    #allocation3 [shape = 's32[1]{0}', space=sflag, size = 0x4, scoped, tag = 'scoped memory for tpu_custom_call.1']
    #allocation4 [shape = 's32[1]{0}', space=sflag, size = 0x4, scoped, tag = 'scoped memory for tpu_custom_call.1']
    #allocation5 [shape = 'u8[1024]{0}', space=vmem, size = 0x400, scoped, tag = 'input window, operand 1, single buffered']
    #allocation6 [shape = 's32[1]{0}', space=sflag, size = 0x4, scoped, tag = 'scoped memory for tpu_custom_call.1']
    #allocation7 [shape = 'u8[32768]{0}', space=vmem, size = 0x8000, scoped, tag = 'output window, operand 0, single buffered']
    %8 = vsyncpa [#allocation3], 0
    %9 = vsyncpa [#allocation6], 0
    %10 = vsyncpa [#allocation4], 0
    // Predicated region
    $region2: #{tpu_custom_call.1} parent=1 // pred_check
      _
    $region3: #{tpu_custom_call.1} parent=1 // pred_check_branch
      %12 = sbr.rel (0) target = $region5
    $region4: #{tpu_custom_call.1} parent=1 // pred_region
      %s14 = ssub.s32 1024, 1024
      %15 = vsyncadd [#allocation3], %s14
      %s16 = sshll.u32 [#allocation2], 4
      %s17 = int_to_ptr.vmem [resolvable:$true] %s16
      %22 = dma.hbm_to_vmem [thread:$0]  %s0, 1024, %s17, [#allocation3], 256, 256, 16
    $region5: #{tpu_custom_call.1} parent=1 // pred_fallthru
      _
    // Predicated region
    $region6: #{tpu_custom_call.1} parent=1 // pred_check
      _
    $region7: #{tpu_custom_call.1} parent=1 // pred_check_branch
      %24 = sbr.rel (0) target = $region9
    $region8: #{tpu_custom_call.1} parent=1 // pred_region
      %s26 = ssub.s32 32, 32
      %27 = vsyncadd [#allocation6], %s26
      %s29 = sshll.u32 [#allocation5], 4
      %s30 = int_to_ptr.vmem [resolvable:$true] %s29
      %32 = dma.hbm_to_vmem [thread:$0]  %s1, 32, %s30, [#allocation6]
    $region9: #{tpu_custom_call.1} parent=1 // pred_fallthru
      _
    // Predicated region
    $region10: #{tpu_custom_call.1} parent=1 // pred_check
      _
    $region11: #{tpu_custom_call.1} parent=1 // pred_check_branch
      %34 = sbr.rel (0) target = $region13
    $region12: #{tpu_custom_call.1} parent=1 // pred_region
      _
    $region13: #{tpu_custom_call.1} parent=1 // pred_fallthru
      _
    // Predicated region
    $region14: #{tpu_custom_call.1} parent=1 // pred_check
      _
    $region15: #{tpu_custom_call.1} parent=1 // pred_check_branch
      %36 = sbr.rel (0) target = $region17
    $region16: #{tpu_custom_call.1} parent=1 // pred_region
      %37 = dma.done [#allocation3], 1024
    $region17: #{tpu_custom_call.1} parent=1 // pred_fallthru
      _
    // Predicated region
    $region18: #{tpu_custom_call.1} parent=1 // pred_check
      _
    $region19: #{tpu_custom_call.1} parent=1 // pred_check_branch
      %39 = sbr.rel (0) target = $region21
    $region20: #{tpu_custom_call.1} parent=1 // pred_region
      %40 = dma.done [#allocation6], 32
    $region21: #{tpu_custom_call.1} parent=1 // pred_fallthru
      _
    %v41 = vld [vmem:[#allocation2] sm:$0xff]
    %v42 = vld [vmem:[#allocation2 + $0x8] sm:$0xff]
    %v43 = vld [vmem:[#allocation2 + $0x10] sm:$0xff]
    %v44 = vld [vmem:[#allocation2 + $0x18] sm:$0xff]
    %v45 = vld [vmem:[#allocation2 + $0x20] sm:$0xff]
    %v46 = vld [vmem:[#allocation2 + $0x28] sm:$0xff]
    %v47 = vld [vmem:[#allocation2 + $0x30] sm:$0xff]
    %v48 = vld [vmem:[#allocation2 + $0x38] sm:$0xff]
    %v49 = vadd.f32 %v41, %v42
    %50 = vadd.xlane.f32.xlu0 %v49
    %v51 = vpop.xlane.xlu0 %50
    %v52 = vadd.f32 %v43, %v44
    %53 = vadd.xlane.f32.xlu0 %v52
    %v54 = vpop.xlane.xlu0 %53
    %v55 = vadd.f32 %v45, %v46
    %56 = vadd.xlane.f32.xlu0 %v55
    %v57 = vpop.xlane.xlu0 %56
    %v58 = vadd.f32 %v47, %v48
    %59 = vadd.xlane.f32.xlu0 %v58
    %v60 = vpop.xlane.xlu0 %59
    %v61 = vrcp.pop 256.0
    %v62 = vmul.f32 %v51, %v61
    %v63 = vmul.f32 %v54, %v61
    %v64 = vmul.f32 %v57, %v61
    %v65 = vmul.f32 %v60, %v61
    %v66 = vsub.f32 %v41, %v62
    %v67 = vsub.f32 %v42, %v62
    %v68 = vsub.f32 %v43, %v63
    %v69 = vsub.f32 %v44, %v63
    %v70 = vsub.f32 %v45, %v64
    %v71 = vsub.f32 %v46, %v64
    %v72 = vsub.f32 %v47, %v65
    %v73 = vsub.f32 %v48, %v65
    %v74 = vmul.f32 %v66, %v66
    %v75 = vmul.f32 %v67, %v67
    %v76 = vmul.f32 %v68, %v68
    %v77 = vmul.f32 %v69, %v69
    %v78 = vmul.f32 %v70, %v70
    %v79 = vmul.f32 %v71, %v71
    %v80 = vmul.f32 %v72, %v72
    %v81 = vmul.f32 %v73, %v73
    %v82 = vadd.f32 %v74, %v75
    %83 = vadd.xlane.f32.xlu0 %v82
    %v84 = vpop.xlane.xlu0 %83
    %v85 = vadd.f32 %v76, %v77
    %86 = vadd.xlane.f32.xlu0 %v85
    %v87 = vpop.xlane.xlu0 %86
    %v88 = vadd.f32 %v78, %v79
    %89 = vadd.xlane.f32.xlu0 %v88
    %v90 = vpop.xlane.xlu0 %89
    %v91 = vadd.f32 %v80, %v81
    %92 = vadd.xlane.f32.xlu0 %v91
    %v93 = vpop.xlane.xlu0 %92
    %v94 = vmul.f32 %v84, %v61
    %v95 = vmul.f32 %v87, %v61
    %v96 = vmul.f32 %v90, %v61
    %v97 = vmul.f32 %v93, %v61
    %v98 = vadd.f32 %v94, 1e-12
    %v99 = vadd.f32 %v95, 1e-12
    %v100 = vadd.f32 %v96, 1e-12
    %v101 = vadd.f32 %v97, 1e-12
    %v102 = vrsqrt.pop %v98
    %v103 = vrsqrt.pop %v99
    %v104 = vrsqrt.pop %v100
    %v105 = vrsqrt.pop %v101
    %v106 = vmul.f32 %v66, %v102
    %v107 = vmul.f32 %v67, %v102
    %v108 = vmul.f32 %v68, %v103
    %v109 = vmul.f32 %v69, %v103
    %v110 = vmul.f32 %v70, %v104
    %v111 = vmul.f32 %v71, %v104
    %v112 = vmul.f32 %v72, %v105
    %v113 = vmul.f32 %v73, %v105
    %v114 = vld [vmem:[#allocation5] sm:$0x3]
    %v116 = vlaneseq
    %v117 = vshrl.u32 %v116, 7
    %v118 = vsub.s32 0, %v117
    %v119 = vrot.slane %v114, %v118
    %v120 = vlaneseq
    %v121 = vshrl.u32 %v120, 7
    %v122 = vsub.s32 1, %v121
    %v123 = vrot.slane %v114, %v122
    %v126 = vmul.f32 %v106, %v119
    %v127 = vmul.f32 %v107, %v123
    %v128 = vmul.f32 %v108, %v119
    %v129 = vmul.f32 %v109, %v123
    %v130 = vmul.f32 %v110, %v119
    %v131 = vmul.f32 %v111, %v123
    %v132 = vmul.f32 %v112, %v119
    %v133 = vmul.f32 %v113, %v123
    %v134 = vld [vmem:[%s2] sm:$0x3]
    %v136 = vlaneseq
    %v137 = vshrl.u32 %v136, 7
    %v138 = vsub.s32 0, %v137
    %v139 = vrot.slane %v134, %v138
    %v140 = vlaneseq
    %v141 = vshrl.u32 %v140, 7
    %v142 = vsub.s32 1, %v141
    %v143 = vrot.slane %v134, %v142
    %v146 = vadd.f32 %v126, %v139
    %v147 = vadd.f32 %v127, %v143
    %v148 = vadd.f32 %v128, %v139
    %v149 = vadd.f32 %v129, %v143
    %v150 = vadd.f32 %v130, %v139
    %v151 = vadd.f32 %v131, %v143
    %v152 = vadd.f32 %v132, %v139
    %v153 = vadd.f32 %v133, %v143
    %154 = vst [vmem:[#allocation7] sm:$0xff] %v146
    %155 = vst [vmem:[#allocation7 + $0x8] sm:$0xff] %v147
    %156 = vst [vmem:[#allocation7 + $0x10] sm:$0xff] %v148
    %157 = vst [vmem:[#allocation7 + $0x18] sm:$0xff] %v149
    %158 = vst [vmem:[#allocation7 + $0x20] sm:$0xff] %v150
    %159 = vst [vmem:[#allocation7 + $0x28] sm:$0xff] %v151
    %160 = vst [vmem:[#allocation7 + $0x30] sm:$0xff] %v152
    %161 = vst [vmem:[#allocation7 + $0x38] sm:$0xff] %v153
    // Predicated region
    $region22: #{tpu_custom_call.1} parent=1 // pred_check
      _
    $region23: #{tpu_custom_call.1} parent=1 // pred_check_branch
      %163 = sbr.rel (0) target = $region25
    $region24: #{tpu_custom_call.1} parent=1 // pred_region
      %s165 = ssub.s32 1024, 1024
      %166 = vsyncadd [#allocation4], %s165
      %s167 = sshll.u32 [#allocation7], 4
      %s168 = int_to_ptr.vmem [resolvable:$true] %s167
      %173 = dma.vmem_to_hbm [thread:$0]  %s168, 1024, %s3, [#allocation4], 256, 256, 16
    $region25: #{tpu_custom_call.1} parent=1 // pred_fallthru
      _
    // Predicated region
    $region26: #{tpu_custom_call.1} parent=1 // pred_check
      _
    $region27: #{tpu_custom_call.1} parent=1 // pred_check_branch
      %175 = sbr.rel (0) target = $region29
    $region28: #{tpu_custom_call.1} parent=1 // pred_region
      %176 = dma.done [#allocation4], 1024
    $region29: #{tpu_custom_call.1} parent=1 // pred_fallthru
      _
    %177 = vsyncpa [#allocation3], 1
    %178 = vsyncpa [#allocation6], 1
    %179 = vsyncpa [#allocation4], 1

</llo_original>
